<compile_context>
chip_gen: v7x
topology: tpu7x:2x2x1
jax: 0.10.0
libtpu: 0.0.40
codegen_flags: <defaults>
</compile_context>

<pallas_src>
import numpy as np
import jax
import jax.numpy as jnp
from jax.experimental import pallas as pl
from jax.experimental.pallas import tpu as pltpu

SMOOTH = 1e-6
_MIB = 1024 * 1024


# ---------------------------------------------------------------------------
# Static host-side helpers: VMEM budgeting and tile-size selection
# ---------------------------------------------------------------------------
def _cdiv(a, b):
    return -(-a // b)


def _vmem_plan():
    """(pipeline_budget_bytes, vmem_limit_bytes) sized per TPU generation."""
    try:
        cap = int(pltpu.get_tpu_info().vmem_capacity_bytes)
    except Exception:
        cap = 64 * _MIB            # conservative fallback: v7x physical VMEM
    cap = max(cap, 32 * _MIB)
    # v7x (64 MiB)  -> ~24 MiB pipeline, 40 MiB scoped limit
    # v5e/v6e (128) -> ~48 MiB pipeline, 64 MiB scoped limit (>> 16 MiB default)
    budget = max(16 * _MIB, min(cap // 2 - 8 * _MIB, 48 * _MIB))
    limit = min(cap - 8 * _MIB, budget + 16 * _MIB)
    return budget, max(limit, budget)


def _largest_dividing_128mult(total, cap):
    """Largest multiple of 128 that divides `total` and is <= cap (0 if none)."""
    d = (cap // 128) * 128
    while d >= 128:
        if total % d == 0:
            return d
        d -= 128
    return 0


def _choose_sem_tile(C, hw, pred_itemsize, budget, max_lanes=65536):
    """Pixel-tile width (lanes) for the semantic kernel.

    Per-lane cost ~= double-buffered pred (2*C*itemsize) + double-buffered
    int32 target (2*4 B) + ~6 live (C, tp) f32 intermediates.
    """
    per_lane = 2 * C * pred_itemsize + 2 * 4 + 6 * C * 4
    tp = int(budget // per_lane)
    tp = max(128, min(max_lanes, (tp // 128) * 128))
    if hw <= tp:
        return hw, 1                      # full-extent block: always layout-legal
    exact = _largest_dividing_128mult(hw, tp)
    if exact >= tp // 2:                  # no per-tile tail masking, barely smaller
        return exact, hw // exact
    return tp, _cdiv(hw, tp)              # big tiles + masked ragged tail


def _choose_inst_tile(R, W, p_isz, t_isz, budget):
    tw = min(W, 4096)
    if tw < W:
        exact = _largest_dividing_128mult(W, tw)
        if exact >= tw // 2:
            tw = exact
    per_row = tw * (2 * p_isz + 2 * t_isz + 3 * 4)   # dbl-buffered inputs + temps
    tr = int(budget // per_row)
    tr = max(8, min((tr // 8) * 8, 512))
    if tr >= R:
        tr = R                                        # full extent is always legal
    return tr, tw


def _factor_2d(P):
    """Lane-dense (R, W) view of the largest 128-aligned prefix of P elements.

    Returns (R, W) with R*W <= P and P - R*W < 128 (tail handled in glue).
    Returns (0, 0) when P < 128 (handle fully in plain JAX).
    """
    def pick(n):
        cands = [w for w in range(128, min(n, 8192) + 1, 128) if n % w == 0]
        if not cands:
            return None
        good = [w for w in cands if n // w >= 8]      # keep sublanes busy if possible
        w = max(good) if good else max(cands)
        return n // w, w

    got = pick(P)
    if got is not None:
        return got
    main = (P // 128) * 128
    if main == 0:
        return 0, 0
    return pick(main)                                  # 128 | main, always succeeds


# ---------------------------------------------------------------------------
# Semantic-segmentation kernel: pred (N, C, H, W) logits, target (N, H, W) ids
# ---------------------------------------------------------------------------
def _make_sem_kernel(hw, tp):
    has_tail = (hw % tp) != 0

    def kernel(pred_ref, tgt_ref, out_ref, inter_acc, psum_acc, tsum_acc):
        # pred_ref: (C, tp) logits tile (native dtype); tgt_ref: (1, tp) int32
        # out_ref : (C, 3) [intersection | pred_sum | target_sum], written once
        i = pl.program_id(2)

        @pl.when(i == 0)
        def _():
            inter_acc[...] = jnp.zeros_like(inter_acc)
            psum_acc[...] = jnp.zeros_like(psum_acc)
            tsum_acc[...] = jnp.zeros_like(tsum_acc)

        p = pred_ref[...].astype(jnp.float32)          # (C, tp)
        t = tgt_ref[...]                               # (1, tp) int32
        C = p.shape[0]

        # per-pixel softmax over the channel (sublane) axis
        m = jnp.max(p, axis=0, keepdims=True)          # (1, tp)
        e = jnp.exp(p - m)
        inv = pl.reciprocal(jnp.sum(e, axis=0, keepdims=True), approx=True)
        soft = e * inv                                 # (C, tp)

        cls = jax.lax.broadcasted_iota(jnp.int32, (C, tp), 0)
        hit = (t == cls)                               # (C, tp) bool
        if has_tail:
            # Only the ragged last tile has undefined lanes; scrub them with
            # selects so NaN/Inf from padded lanes never reaches the sums.
            g = pl.program_id(1) * pl.num_programs(2) + i
            lane = jax.lax.broadcasted_iota(jnp.int32, (1, tp), 1)
            valid = (g * tp + lane) < hw               # (1, tp) bool
            soft = jnp.where(valid, soft, 0.0)
            hit = hit & valid
        onehot = hit.astype(jnp.float32)

        inter_acc[...] += jnp.sum(soft * onehot, axis=1, keepdims=True)  # (C, 1)
        psum_acc[...] += jnp.sum(soft, axis=1, keepdims=True)
        tsum_acc[...] += jnp.sum(onehot, axis=1, keepdims=True)

        @pl.when(i == pl.num_programs(2) - 1)
        def _():
            out_ref[...] = jnp.concatenate(
                [inter_acc[...], psum_acc[...], tsum_acc[...]], axis=1)

    return kernel


def dice_loss_semantic(pred, target, smooth=SMOOTH):
    N, C, H, W = pred.shape
    HW = H * W
    pred3 = pred.reshape(N, C, HW)                     # free reshape, keep dtype
    tgt3 = target.reshape(N, 1, HW).astype(jnp.int32)

    budget, vmem_limit = _vmem_plan()
    tp, n_tiles = _choose_sem_tile(C, HW, pred.dtype.itemsize, budget)

    # Extra parallel axis so v7x's second TensorCore has work when N == 1.
    if N == 1 and n_tiles >= 2 and n_tiles % 2 == 0:
        p_split, tiles_per = 2, n_tiles // 2
    else:
        p_split, tiles_per = 1, n_tiles

    sums = pl.pallas_call(
        _make_sem_kernel(HW, tp),
        out_shape=jax.ShapeDtypeStruct((N, p_split, C, 3), jnp.float32),
        grid_spec=pltpu.PrefetchScalarGridSpec(
            num_scalar_prefetch=0,
            grid=(N, p_split, tiles_per),
            in_specs=[
                pl.BlockSpec((None, C, tp), lambda n, p, i: (n, 0, p * tiles_per + i)),
                pl.BlockSpec((None, 1, tp), lambda n, p, i: (n, 0, p * tiles_per + i)),
            ],
            out_specs=pl.BlockSpec((None, None, C, 3), lambda n, p, i: (n, p, 0, 0)),
            scratch_shapes=[pltpu.VMEM((C, 1), jnp.float32)] * 3,
        ),
        compiler_params=pltpu.CompilerParams(
            dimension_semantics=("parallel", "parallel", "arbitrary"),
            vmem_limit_bytes=vmem_limit),
    )(pred3, tgt3)

    totals = jnp.sum(sums, axis=(0, 1))                # (C, 3)
    inter, psum, tsum = totals[:, 0], totals[:, 1], totals[:, 2]
    dice = (2.0 * inter + smooth) / (psum + tsum + smooth)
    # torch.unique(target) == classes actually present (target_sum > 0)
    present = (tsum > 0).astype(jnp.float32)
    mean_dice = jnp.sum(dice * present) / jnp.maximum(jnp.sum(present), 1.0)
    return 1.0 - mean_dice


# ---------------------------------------------------------------------------
# Instance-segmentation kernel: pred (N, H, W) float, target (N, H, W) float
# ---------------------------------------------------------------------------
def _make_inst_kernel(R, W, tr, tw):
    tail_r = (R % tr) != 0
    tail_w = (W % tw) != 0

    def kernel(pred_ref, tgt_ref, out_ref, inter_acc, psum_acc, tsum_acc):
        # pred_ref / tgt_ref: (tr, tw); out_ref: (1, 3), written once per group
        wi = pl.program_id(1) * pl.num_programs(2) + pl.program_id(2)

        @pl.when(pl.program_id(2) == 0)
        def _():
            inter_acc[...] = jnp.zeros_like(inter_acc)
            psum_acc[...] = jnp.zeros_like(psum_acc)
            tsum_acc[...] = jnp.zeros_like(tsum_acc)

        p = pred_ref[...].astype(jnp.float32)
        t = tgt_ref[...].astype(jnp.float32)

        if tail_r or tail_w:
            mask = None
            if tail_r:
                row = jax.lax.broadcasted_iota(jnp.int32, (tr, tw), 0) \
                    + pl.program_id(0) * tr
                mask = row < R
            if tail_w:
                col = jax.lax.broadcasted_iota(jnp.int32, (tr, tw), 1) + wi * tw
                cm = col < W
                mask = cm if mask is None else (mask & cm)
            p = jnp.where(mask, p, 0.0)
            t = jnp.where(mask, t, 0.0)

        inter_acc[...] += jnp.sum(p * t, keepdims=True)   # (1, 1)
        psum_acc[...] += jnp.sum(p, keepdims=True)
        tsum_acc[...] += jnp.sum(t, keepdims=True)

        @pl.when(pl.program_id(2) == pl.num_programs(2) - 1)
        def _():
            out_ref[...] = jnp.concatenate(
                [inter_acc[...], psum_acc[...], tsum_acc[...]], axis=1)

    return kernel


def dice_loss_instance(pred, target, smooth=SMOOTH):
    pred_f = pred.reshape(-1)
    tgt_f = target.reshape(-1)
    P = int(pred_f.shape[0])
    R, W = _factor_2d(P)

    if R == 0:
        # Tiny input (< 128 elements): plain JAX, a kernel would be all overhead.
        pf = pred_f.astype(jnp.float32)
        tf = tgt_f.astype(jnp.float32)
        inter = jnp.sum(pf * tf)
        psum = jnp.sum(pf)
        tsum = jnp.sum(tf)
        dice = (2.0 * inter + smooth) / (psum + tsum + smooth)
        return 1.0 - dice

    main = R * W
    pred2 = pred_f[:main].reshape(R, W)
    tgt2 = tgt_f[:main].reshape(R, W)

    budget, vmem_limit = _vmem_plan()
    tr, tw = _choose_inst_tile(R, W, pred.dtype.itemsize, target.dtype.itemsize,
                               budget)
    grid_r = _cdiv(R, tr)
    grid_w = _cdiv(W, tw)

    # Extra parallel axis so v7x's second TensorCore has work when grid_r == 1.
    if grid_r == 1 and grid_w >= 2 and grid_w % 2 == 0:
        p_split, w_per = 2, grid_w // 2
    else:
        p_split, w_per = 1, grid_w

    sums = pl.pallas_call(
        _make_inst_kernel(R, W, tr, tw),
        out_shape=jax.ShapeDtypeStruct((grid_r, p_split, 1, 3), jnp.float32),
        grid_spec=pltpu.PrefetchScalarGridSpec(
            num_scalar_prefetch=0,
            grid=(grid_r, p_split, w_per),
            in_specs=[
                pl.BlockSpec((tr, tw), lambda r, p, i: (r, p * w_per + i)),
                pl.BlockSpec((tr, tw), lambda r, p, i: (r, p * w_per + i)),
            ],
            out_specs=pl.BlockSpec((None, None, 1, 3), lambda r, p, i: (r, p, 0, 0)),
            scratch_shapes=[pltpu.VMEM((1, 1), jnp.float32)] * 3,
        ),
        compiler_params=pltpu.CompilerParams(
            dimension_semantics=("parallel", "parallel", "arbitrary"),
            vmem_limit_bytes=vmem_limit),
    )(pred2, tgt2)

    totals = jnp.sum(sums, axis=(0, 1))[0]             # (3,)
    inter, psum, tsum = totals[0], totals[1], totals[2]

    if main < P:                                       # < 128-element scalar tail
        pt = pred_f[main:].astype(jnp.float32)
        tt = tgt_f[main:].astype(jnp.float32)
        inter = inter + jnp.sum(pt * tt)
        psum = psum + jnp.sum(pt)
        tsum = tsum + jnp.sum(tt)

    dice = (2.0 * inter + smooth) / (psum + tsum + smooth)
    return 1.0 - dice


def dice_loss(pred, target, smooth=SMOOTH):
    """Matches DiceLoss.forward: 4-D pred -> semantic mode, else instance mode."""
    if pred.ndim == 4:
        return dice_loss_semantic(pred, target, smooth)
    return dice_loss_instance(pred, target, smooth)


# ---------------------------------------------------------------------------
# Pure-NumPy references (host side) for verification
# ---------------------------------------------------------------------------
def _ref_semantic(pred, target, smooth=SMOOTH):
    pred = np.asarray(pred, np.float32)
    target = np.asarray(target)
    e = np.exp(pred - pred.max(axis=1, keepdims=True))
    soft = e / e.sum(axis=1, keepdims=True)
    scores = []
    for i in np.unique(target):
        pi = soft[:, int(i), :, :]
        ti = (target == i).astype(np.float32)
        inter = (pi * ti).sum()
        union = pi.sum() + ti.sum()
        scores.append((2.0 * inter + smooth) / (union + smooth))
    return 1.0 - float(np.mean(scores))


def _ref_instance(pred, target, smooth=SMOOTH):
    pred = np.asarray(pred, np.float32)
    target = np.asarray(target, np.float32)
    inter = (pred * target).sum()
    union = pred.sum() + target.sum()
    return 1.0 - float((2.0 * inter + smooth) / (union + smooth))


if __name__ == "__main__":
    key = jax.random.PRNGKey(0)
    k1, k2, k3, k4 = jax.random.split(key, 4)

    dice_fn = jax.jit(dice_loss)

    # Semantic segmentation mode: pred (N, C, H, W) logits, target (N, H, W) ids
    N, C, H, W = 2, 4, 16, 16
    pred_sem = jax.random.normal(k1, (N, C, H, W), dtype=jnp.float32)
    tgt_sem = jax.random.randint(k2, (N, H, W), 0, C, dtype=jnp.int32)

    loss_sem = jax.block_until_ready(dice_fn(pred_sem, tgt_sem))
    ref_sem = _ref_semantic(pred_sem, tgt_sem)
    # approx reciprocal in the in-kernel softmax -> ~1e-4-level error on the loss
    assert abs(float(loss_sem) - ref_sem) < 3e-3, (float(loss_sem), ref_sem)

    # Instance segmentation mode: pred (N, H, W) probs, target (N, H, W) {0,1}
    pred_inst = jax.nn.sigmoid(jax.random.normal(k3, (N, H, W), dtype=jnp.float32))
    tgt_inst = (jax.random.uniform(k4, (N, H, W)) > 0.5).astype(jnp.float32)

    loss_inst = jax.block_until_ready(dice_fn(pred_inst, tgt_inst))
    ref_inst = _ref_instance(pred_inst, tgt_inst)
    assert abs(float(loss_inst) - ref_inst) < 1e-4, (float(loss_inst), ref_inst)

    print("KERNEL_OK")
</pallas_src>

<mosaic_0001>
module attributes {stable_mosaic.version = 11 : i64} {
  func.func @kernel(%arg0: i32, %arg1: i32, %arg2: i32, %arg3: memref<1x4x256xf32, #tpu.memory_space<vmem>>, %arg4: memref<1x1x256xi32, #tpu.memory_space<vmem>>, %arg5: memref<1x1x4x3xf32, #tpu.memory_space<vmem>>, %arg6: memref<4x1xf32, #tpu.memory_space<vmem>>, %arg7: memref<4x1xf32, #tpu.memory_space<vmem>>, %arg8: memref<4x1xf32, #tpu.memory_space<vmem>>) attributes {dimension_semantics = [#tpu.dimension_semantics<parallel>, #tpu.dimension_semantics<parallel>, #tpu.dimension_semantics<arbitrary>], iteration_bounds = array<i64: 2, 1, 1>, scalar_prefetch = 0 : i64, scratch_operands = 3 : i64, tpu.core_type = #tpu.core_type<tc>, window_params = [{transform_indices = @transform_0, window_bounds = array<i64: 1, 4, 256>}, {transform_indices = @transform_1, window_bounds = array<i64: 1, 1, 256>}, {transform_indices = @transform_2, window_bounds = array<i64: 1, 1, 4, 3>}]} {
    %c0_i32 = arith.constant 0 : i32
    %0 = arith.cmpi eq, %arg2, %c0_i32 : i32
    %1 = arith.extui %0 : i1 to i32
    %c0_i32_0 = arith.constant 0 : i32
    %2 = arith.cmpi ne, %1, %c0_i32_0 : i32
    scf.if %2 {
      %cst_24 = arith.constant 0.000000e+00 : f32
      %41 = vector.broadcast %cst_24 : f32 to vector<4x1xf32>
      %c0_25 = arith.constant 0 : index
      %c0_26 = arith.constant 0 : index
      %42 = vector.load %arg6[%c0_25, %c0_26] : memref<4x1xf32, #tpu.memory_space<vmem>>, vector<4x1xf32>
      tpu.vector_store %arg6[%c0_25, %c0_26], %41 {strides = array<i32>} : memref<4x1xf32, #tpu.memory_space<vmem>>, vector<4x1xf32>,
      %cst_27 = arith.constant 0.000000e+00 : f32
      %43 = vector.broadcast %cst_27 : f32 to vector<4x1xf32>
      %c0_28 = arith.constant 0 : index
      %c0_29 = arith.constant 0 : index
      %44 = vector.load %arg7[%c0_28, %c0_29] : memref<4x1xf32, #tpu.memory_space<vmem>>, vector<4x1xf32>
      tpu.vector_store %arg7[%c0_28, %c0_29], %43 {strides = array<i32>} : memref<4x1xf32, #tpu.memory_space<vmem>>, vector<4x1xf32>,
      %cst_30 = arith.constant 0.000000e+00 : f32
      %45 = vector.broadcast %cst_30 : f32 to vector<4x1xf32>
      %c0_31 = arith.constant 0 : index
      %c0_32 = arith.constant 0 : index
      %46 = vector.load %arg8[%c0_31, %c0_32] : memref<4x1xf32, #tpu.memory_space<vmem>>, vector<4x1xf32>
      tpu.vector_store %arg8[%c0_31, %c0_32], %45 {strides = array<i32>} : memref<4x1xf32, #tpu.memory_space<vmem>>, vector<4x1xf32>,
    } else {
    }
    %c0 = arith.constant 0 : index
    %c0_1 = arith.constant 0 : index
    %c0_2 = arith.constant 0 : index
    %3 = vector.load %arg3[%c0, %c0_1, %c0_2] : memref<1x4x256xf32, #tpu.memory_space<vmem>>, vector<1x4x256xf32>
    %4 = vector.shape_cast %3 : vector<1x4x256xf32> to vector<4x256xf32>
    %c0_3 = arith.constant 0 : index
    %c0_4 = arith.constant 0 : index
    %c0_5 = arith.constant 0 : index
    %5 = vector.load %arg4[%c0_3, %c0_4, %c0_5] : memref<1x1x256xi32, #tpu.memory_space<vmem>>, vector<1x1x256xi32>
    %6 = vector.shape_cast %5 : vector<1x1x256xi32> to vector<1x256xi32>
    %cst = arith.constant dense<0xFF800000> : vector<256xf32>
    %7 = vector.multi_reduction <maximumf>, %4, %cst [0] : vector<4x256xf32> to vector<256xf32>
    %8 = vector.shape_cast %7 : vector<256xf32> to vector<1x256xf32>
    %9 = vector.broadcast %8 : vector<1x256xf32> to vector<4x256xf32>
    %10 = arith.subf %4, %9 : vector<4x256xf32>
    %11 = math.exp %10 : vector<4x256xf32>
    %cst_6 = arith.constant dense<0.000000e+00> : vector<256xf32>
    %12 = vector.multi_reduction <add>, %11, %cst_6 [0] : vector<4x256xf32> to vector<256xf32>
    %13 = vector.shape_cast %12 : vector<256xf32> to vector<1x256xf32>
    %14 = tpu.reciprocal %13 {approx = true} : vector<1x256xf32> -> vector<1x256xf32>
    %15 = vector.broadcast %14 : vector<1x256xf32> to vector<4x256xf32>
    %16 = arith.mulf %11, %15 : vector<4x256xf32>
    %17 = tpu.iota {dimensions = array<i32: 0>} : vector<4x256xi32>
    %18 = vector.broadcast %6 : vector<1x256xi32> to vector<4x256xi32>
    %19 = arith.cmpi eq, %18, %17 : vector<4x256xi32>
    %20 = arith.extui %19 : vector<4x256xi1> to vector<4x256xi32>
    %21 = arith.sitofp %20 : vector<4x256xi32> to vector<4x256xf32>
    %c0_7 = arith.constant 0 : index
    %c0_8 = arith.constant 0 : index
    %22 = vector.load %arg6[%c0_7, %c0_8] : memref<4x1xf32, #tpu.memory_space<vmem>>, vector<4x1xf32>
    %23 = arith.mulf %16, %21 : vector<4x256xf32>
    %cst_9 = arith.constant dense<0.000000e+00> : vector<4xf32>
    %24 = vector.multi_reduction <add>, %23, %cst_9 [1] : vector<4x256xf32> to vector<4xf32>
    %25 = vector.shape_cast %24 : vector<4xf32> to vector<4x1xf32>
    %26 = arith.addf %22, %25 : vector<4x1xf32>
    %c0_10 = arith.constant 0 : index
    %c0_11 = arith.constant 0 : index
    %27 = vector.load %arg6[%c0_10, %c0_11] : memref<4x1xf32, #tpu.memory_space<vmem>>, vector<4x1xf32>
    tpu.vector_store %arg6[%c0_10, %c0_11], %26 {strides = array<i32>} : memref<4x1xf32, #tpu.memory_space<vmem>>, vector<4x1xf32>,
    %c0_12 = arith.constant 0 : index
    %c0_13 = arith.constant 0 : index
    %28 = vector.load %arg7[%c0_12, %c0_13] : memref<4x1xf32, #tpu.memory_space<vmem>>, vector<4x1xf32>
    %cst_14 = arith.constant dense<0.000000e+00> : vector<4xf32>
    %29 = vector.multi_reduction <add>, %16, %cst_14 [1] : vector<4x256xf32> to vector<4xf32>
    %30 = vector.shape_cast %29 : vector<4xf32> to vector<4x1xf32>
    %31 = arith.addf %28, %30 : vector<4x1xf32>
    %c0_15 = arith.constant 0 : index
    %c0_16 = arith.constant 0 : index
    %32 = vector.load %arg7[%c0_15, %c0_16] : memref<4x1xf32, #tpu.memory_space<vmem>>, vector<4x1xf32>
    tpu.vector_store %arg7[%c0_15, %c0_16], %31 {strides = array<i32>} : memref<4x1xf32, #tpu.memory_space<vmem>>, vector<4x1xf32>,
    %c0_17 = arith.constant 0 : index
    %c0_18 = arith.constant 0 : index
    %33 = vector.load %arg8[%c0_17, %c0_18] : memref<4x1xf32, #tpu.memory_space<vmem>>, vector<4x1xf32>
    %cst_19 = arith.constant dense<0.000000e+00> : vector<4xf32>
    %34 = vector.multi_reduction <add>, %21, %cst_19 [1] : vector<4x256xf32> to vector<4xf32>
    %35 = vector.shape_cast %34 : vector<4xf32> to vector<4x1xf32>
    %36 = arith.addf %33, %35 : vector<4x1xf32>
    %c0_20 = arith.constant 0 : index
    %c0_21 = arith.constant 0 : index
    %37 = vector.load %arg8[%c0_20, %c0_21] : memref<4x1xf32, #tpu.memory_space<vmem>>, vector<4x1xf32>
    tpu.vector_store %arg8[%c0_20, %c0_21], %36 {strides = array<i32>} : memref<4x1xf32, #tpu.memory_space<vmem>>, vector<4x1xf32>,
    %c0_i32_22 = arith.constant 0 : i32
    %38 = arith.cmpi eq, %arg2, %c0_i32_22 : i32
    %39 = arith.extui %38 : i1 to i32
    %c0_i32_23 = arith.constant 0 : i32
    %40 = arith.cmpi ne, %39, %c0_i32_23 : i32
    scf.if %40 {
      %c0_24 = arith.constant 0 : index
      %c0_25 = arith.constant 0 : index
      %41 = vector.load %arg6[%c0_24, %c0_25] : memref<4x1xf32, #tpu.memory_space<vmem>>, vector<4x1xf32>
      %c0_26 = arith.constant 0 : index
      %c0_27 = arith.constant 0 : index
      %42 = vector.load %arg7[%c0_26, %c0_27] : memref<4x1xf32, #tpu.memory_space<vmem>>, vector<4x1xf32>
      %c0_28 = arith.constant 0 : index
      %c0_29 = arith.constant 0 : index
      %43 = vector.load %arg8[%c0_28, %c0_29] : memref<4x1xf32, #tpu.memory_space<vmem>>, vector<4x1xf32>
      %44 = tpu.concatenate %41, %42, %43 in 1 : vector<4x1xf32>, vector<4x1xf32>, vector<4x1xf32> -> vector<4x3xf32>
      %c0_30 = arith.constant 0 : index
      %c0_31 = arith.constant 0 : index
      %c0_32 = arith.constant 0 : index
      %c0_33 = arith.constant 0 : index
      %45 = vector.load %arg5[%c0_30, %c0_31, %c0_32, %c0_33] : memref<1x1x4x3xf32, #tpu.memory_space<vmem>>, vector<1x1x4x3xf32>
      %46 = vector.shape_cast %45 : vector<1x1x4x3xf32> to vector<4x3xf32>
      %47 = vector.shape_cast %44 : vector<4x3xf32> to vector<1x1x4x3xf32>
      tpu.vector_store %arg5[%c0_30, %c0_31, %c0_32, %c0_33], %47 {strides = array<i32>} : memref<1x1x4x3xf32, #tpu.memory_space<vmem>>, vector<1x1x4x3xf32>,
    } else {
    }
    return
  }
  func.func @transform_0(%arg0: i32, %arg1: i32, %arg2: i32) -> (i32, i32, i32) {
    %c1_i32 = arith.constant 1 : i32
    %0 = arith.muli %arg1, %c1_i32 : i32
    %1 = arith.addi %0, %arg2 : i32
    %c0_i32 = arith.constant 0 : i32
    %c0_i32_0 = arith.constant 0 : i32
    return %arg0, %c0_i32, %1 : i32, i32, i32
  }
  func.func @transform_1(%arg0: i32, %arg1: i32, %arg2: i32) -> (i32, i32, i32) {
    %c1_i32 = arith.constant 1 : i32
    %0 = arith.muli %arg1, %c1_i32 : i32
    %1 = arith.addi %0, %arg2 : i32
    %c0_i32 = arith.constant 0 : i32
    %c0_i32_0 = arith.constant 0 : i32
    return %arg0, %c0_i32, %1 : i32, i32, i32
  }
  func.func @transform_2(%arg0: i32, %arg1: i32, %arg2: i32) -> (i32, i32, i32, i32) {
    %c0_i32 = arith.constant 0 : i32
    %c0_i32_0 = arith.constant 0 : i32
    %c0_i32_1 = arith.constant 0 : i32
    return %arg0, %arg1, %c0_i32, %c0_i32_0 : i32, i32, i32, i32
  }
}

</mosaic_0001>

<llo_original>
// kernel: dice_loss.1
$region0: #{dice_loss.1}
  #allocation0 [shape = 'u32[]', space=smem, size = 0x4, offset = 0x4, fixed_abs, tag = 'smem constant byte address 0x4 - core index']
  #allocation1 [shape = 'u32[144,128]{1,0:T(1,128)}', space=vmem, size = 0x12000, scoped, tag = 'internal scratch']
  #allocation2 [shape = 'f32[4,1]{1,0:T(4,128)}', space=vmem, size = 0x800, scoped, tag = 'scratch operand']
  #allocation3 [shape = 'f32[4,1]{1,0:T(4,128)}', space=vmem, size = 0x800, scoped, tag = 'scratch operand']
  #allocation4 [shape = 'f32[4,1]{1,0:T(4,128)}', space=vmem, size = 0x800, scoped, tag = 'scratch operand']
  %s0 = inlined_call_operand.vmem [shape: f32[2,4,256], index: 0, kind: input, shape index: {}]
  %s1 = inlined_call_operand.vmem [shape: s32[2,1,256], index: 1, kind: input, shape index: {}]
  %s2 = inlined_call_operand.vmem [shape: f32[2,1,4,3], index: 2, kind: output, shape index: {}]
  %s3 = sld [smem:[#allocation0]]
  $region49: #{dice_loss.1} parent=0
    _
  %s5 = ssub.s32 1, %s3
  %s6 = scalar_select 0, %s5, %s3
  loop: start=0, step=1, limit=4
  $region2: #{dice_loss.1} parent=0 // loop_pre_header
    _
  $region3: #{dice_loss.1} parent=0 // loop_header
    %s8 = sphi 0, %s12
    %p9 = scmp.ge.s32.totalorder %s8, 4
    %s15 = sphi 0, %s34
    %s16 = sphi 0, %s30
    %s17 = sphi 0, %s26
    %s18 = sphi 0, %s15
    %s19 = sphi 0, %s16
    %s20 = sphi 0, %s17
    %s21 = sphi 0, %s18
    %s22 = sphi 0, %s19
    %s23 = sphi 0, %s20
    %s41 = sphi 0, %s43
    %s44 = sphi 0, %s41
    %s45 = sphi 0, %s44
    %s61 = sphi 0, %s45
    %s71 = sphi 0, %s73
    %s74 = sphi 0, %s71
    %s75 = sphi 0, %s74
    %s91 = sphi 0, %s75
    %s99 = sphi 0, %s101
    %s102 = sphi 0, %s99
    %s103 = sphi 0, %s102
    %s119 = sphi 0, %s103
  $region4: #{dice_loss.1} parent=0 // loop_header_branch
    %11 = sbr.rel (%p9) target = $region8
  $region5: #{dice_loss.1} parent=0 // loop_body
    %s13 = ssub.s32 %s8, 1
    %s14 = ssub.s32 %s8, 2
    %s24 = sadd.s32 1, %s17
    %p25 = scmp.ge.s32.totalorder %s24, 1
    %s26 = scalar_select %p25, 0, %s24
    %s27 = sadd.s32 1, %s16
    %s28 = scalar_select %p25, %s27, %s16
    %p29 = scmp.ge.s32.totalorder %s28, 1
    %s30 = scalar_select %p29, 0, %s28
    %s31 = sadd.s32 1, %s15
    %s32 = scalar_select %p29, %s31, %s15
    %p33 = scmp.ge.s32.totalorder %s32, 2
    %s34 = scalar_select %p33, 0, %s32
    %s35 = sadd.s32 %s16, %s17
    %s36 = sadd.s32 %s30, %s26
    %s37 = ssub.s32 %s15, %s34
    %s38 = ssub.s32 %s35, %s36
    %s39 = sor.u32 %s37, %s38
    %p40 = scmp.eq.s32.totalorder %s39, 0
    %s42 = sadd.s32 %s41, 1
    %s43 = scalar_select %p40, %s41, %s42
    %p46 = pneg %p40
    %p47 = scmp.eq.s32.totalorder %s8, 1
    %p48 = por %p46, %p47
    %p49 = scmp.ne.s32.totalorder %s41, %s44
    %p50 = scmp.eq.s32.totalorder %s8, 0
    %p51 = por %p49, %p50
    %p52 = scmp.ne.s32.totalorder %s41, %s44
    %p53 = scmp.eq.s32.totalorder %s13, 1
    %p54 = por %p52, %p53
    %p55 = scmp.ne.s32.totalorder %s44, %s45
    %p56 = scmp.eq.s32.totalorder %s13, 0
    %p57 = por %p55, %p56
    %p58 = scmp.ne.s32.totalorder %s44, %s45
    %p59 = scmp.eq.s32.totalorder %s14, 1
    %p60 = por %p58, %p59
    %p62 = scmp.ne.s32.totalorder %s45, %s61
    %p63 = scmp.eq.s32.totalorder %s14, 0
    %p64 = por %p62, %p63
    %s65 = sadd.s32 %s16, %s17
    %s66 = sadd.s32 %s30, %s26
    %s67 = ssub.s32 %s15, %s34
    %s68 = ssub.s32 %s65, %s66
    %s69 = sor.u32 %s67, %s68
    %p70 = scmp.eq.s32.totalorder %s69, 0
    %s72 = sadd.s32 %s71, 1
    %s73 = scalar_select %p70, %s71, %s72
    %p76 = pneg %p70
    %p77 = scmp.eq.s32.totalorder %s8, 1
    %p78 = por %p76, %p77
    %p79 = scmp.ne.s32.totalorder %s71, %s74
    %p80 = scmp.eq.s32.totalorder %s8, 0
    %p81 = por %p79, %p80
    %p82 = scmp.ne.s32.totalorder %s71, %s74
    %p83 = scmp.eq.s32.totalorder %s13, 1
    %p84 = por %p82, %p83
    %p85 = scmp.ne.s32.totalorder %s74, %s75
    %p86 = scmp.eq.s32.totalorder %s13, 0
    %p87 = por %p85, %p86
    %p88 = scmp.ne.s32.totalorder %s74, %s75
    %p89 = scmp.eq.s32.totalorder %s14, 1
    %p90 = por %p88, %p89
    %p92 = scmp.ne.s32.totalorder %s75, %s91
    %p93 = scmp.eq.s32.totalorder %s14, 0
    %p94 = por %p92, %p93
    %s95 = ssub.s32 %s15, %s34
    %s96 = ssub.s32 %s16, %s30
    %s97 = sor.u32 %s95, %s96
    %p98 = scmp.eq.s32.totalorder %s97, 0
    %s100 = sadd.s32 %s99, 1
    %s101 = scalar_select %p98, %s99, %s100
    %p104 = pneg %p98
    %p105 = scmp.eq.s32.totalorder %s8, 1
    %p106 = por %p104, %p105
    %p107 = scmp.ne.s32.totalorder %s99, %s102
    %p108 = scmp.eq.s32.totalorder %s8, 0
    %p109 = por %p107, %p108
    %p110 = scmp.ne.s32.totalorder %s99, %s102
    %p111 = scmp.eq.s32.totalorder %s13, 1
    %p112 = por %p110, %p111
    %p113 = scmp.ne.s32.totalorder %s102, %s103
    %p114 = scmp.eq.s32.totalorder %s13, 0
    %p115 = por %p113, %p114
    %p116 = scmp.ne.s32.totalorder %s102, %s103
    %p117 = scmp.eq.s32.totalorder %s14, 1
    %p118 = por %p116, %p117
    %p120 = scmp.ne.s32.totalorder %s103, %s119
    %p121 = scmp.eq.s32.totalorder %s14, 0
    %p122 = por %p120, %p121
    %p123 = scmp.le.s32.totalorder 1, %s8
    %p124 = scmp.lt.s32.totalorder %s8, 3
    %p125 = pnand %p123, %p124
    %p126 = pneg %p125
    // Predicated region
    $region9: #{dice_loss.1} parent=5 // pred_check
      _
    $region10: #{dice_loss.1} parent=5 // pred_check_branch
      %128 = sbr.rel (%p125) target = $region12
    $region11: #{dice_loss.1} parent=5 // pred_region
      %s129 = ssub.s32 %s8, 1
    $region12: #{dice_loss.1} parent=5 // pred_fallthru
      _
    %p130 = scmp.lt.s32.totalorder %s8, 2
    // Predicated region
    $region13: #{dice_loss.1} parent=5 // pred_check
      %p131 = pneg %p130
    $region14: #{dice_loss.1} parent=5 // pred_check_branch
      %133 = sbr.rel (%p131) target = $region16
    $region15: #{dice_loss.1} parent=5 // pred_region
      // Predicated region
      $region17: #{dice_loss.1} parent=15 // pred_check
        %p134 = pneg %p51
      $region18: #{dice_loss.1} parent=15 // pred_check_branch
        %136 = sbr.rel (%p134) target = $region20
      $region19: #{dice_loss.1} parent=15 // pred_region
        %s137 = sadd.s32 %s16, %s17
        %s138 = smul.u32 2, %s137
        %p139 = scmp.lt.s32.totalorder %s15, 1
        %s140 = scalar_select %p139, %s15, 1
        %p141 = scmp.lt.s32.totalorder %s138, 1
        %s142 = scalar_select %p141, %s138, 1
        %s143 = smul.addr %s140, 2
        %s144 = sadd.s32 %s142, %s143
        %s145 = smul.addr %s144, 4
        %s146 = scalar_lea.vmem %s0, %s145
        %s147 = sadd.s32 %s16, %s17
        %s148 = smul.u32 2, %s147
      $region20: #{dice_loss.1} parent=15 // pred_fallthru
        _
      // Predicated region
      $region21: #{dice_loss.1} parent=15 // pred_check
        %p149 = pneg %p81
      $region22: #{dice_loss.1} parent=15 // pred_check_branch
        %151 = sbr.rel (%p149) target = $region24
      $region23: #{dice_loss.1} parent=15 // pred_region
        %s152 = sadd.s32 %s16, %s17
        %s153 = smul.u32 2, %s152
        %p154 = scmp.lt.s32.totalorder %s15, 1
        %s155 = scalar_select %p154, %s15, 1
        %p156 = scmp.lt.s32.totalorder %s153, 1
        %s157 = scalar_select %p156, %s153, 1
        %s158 = smul.addr %s155, 2
        %s159 = sadd.s32 %s157, %s158
        %s160 = scalar_lea.vmem %s1, %s159
        %s161 = sadd.s32 %s16, %s17
        %s162 = smul.u32 2, %s161
      $region24: #{dice_loss.1} parent=15 // pred_fallthru
        _
    $region16: #{dice_loss.1} parent=5 // pred_fallthru
      _
    %p163 = scmp.le.s32.totalorder 1, %s8
    %p164 = scmp.lt.s32.totalorder %s8, 3
    %p165 = pnand %p163, %p164
    %p166 = pneg %p165
    // Predicated region
    $region25: #{dice_loss.1} parent=5 // pred_check
      _
    $region26: #{dice_loss.1} parent=5 // pred_check_branch
      %168 = sbr.rel (%p165) target = $region28
    $region27: #{dice_loss.1} parent=5 // pred_region
      %s169 = ssub.s32 %s8, 1
      %s170 = sadd.s32 %s19, %s20
      %s171 = smul.u32 2, %s170
      %p172 = scmp.lt.s32.totalorder %s18, 1
      %s173 = scalar_select %p172, %s18, 1
      %p174 = scmp.lt.s32.totalorder %s171, 1
      %s175 = scalar_select %p174, %s171, 1
      %s176 = smul.addr %s173, 2
      %s177 = sadd.s32 %s175, %s176
      %s178 = smul.addr %s177, 4
      %s179 = scalar_lea.vmem %s0, %s178
      %p180 = pneg %p57
      %p181 = pneg %p54
      %s182 = sadd.s32 %s19, %s20
      %s183 = smul.u32 2, %s182
      %p184 = scmp.lt.s32.totalorder %s18, 1
      %s185 = scalar_select %p184, %s18, 1
      %p186 = scmp.lt.s32.totalorder %s183, 1
      %s187 = scalar_select %p186, %s183, 1
      %s188 = smul.addr %s185, 2
      %s189 = sadd.s32 %s187, %s188
      %s190 = scalar_lea.vmem %s1, %s189
      %p191 = pneg %p87
      %p192 = pneg %p84
      %p193 = pneg %p115
      %p194 = pneg %p112
      %p195 = scmp.lt.s32.totalorder %s18, 1
      %s196 = scalar_select %p195, %s18, 1
      %p197 = scmp.lt.s32.totalorder %s19, 0
      %s198 = scalar_select %p197, %s19, 0
      %s199 = sadd.s32 %s198, %s196
      %s200 = smul.addr %s199, 4
      %s201 = scalar_lea.vmem %s2, %s200
      %s202 = sadd.s32 %s19, %s20
      %s203 = smul.u32 2, %s202
      %p204 = scmp.lt.s32.totalorder %s18, 1
      %s205 = scalar_select %p204, %s18, 1
      %p206 = scmp.lt.s32.totalorder %s203, 1
      %s207 = scalar_select %p206, %s203, 1
      %s208 = smul.addr %s205, 2
      %s209 = sadd.s32 %s207, %s208
      %s210 = smul.addr %s209, 4
      %s211 = scalar_lea.vmem %s0, %s210
      %s212 = sadd.s32 %s19, %s20
      %s213 = smul.u32 2, %s212
      %s214 = sadd.s32 %s19, %s20
      %s215 = smul.u32 2, %s214
      %p216 = scmp.lt.s32.totalorder %s18, 1
      %s217 = scalar_select %p216, %s18, 1
      %p218 = scmp.lt.s32.totalorder %s215, 1
      %s219 = scalar_select %p218, %s215, 1
      %s220 = smul.addr %s217, 2
      %s221 = sadd.s32 %s219, %s220
      %s222 = scalar_lea.vmem %s1, %s221
      %s223 = sadd.s32 %s19, %s20
      %s224 = smul.u32 2, %s223
      %p225 = scmp.lt.s32.totalorder %s18, 1
      %s226 = scalar_select %p225, %s18, 1
      %p227 = scmp.lt.s32.totalorder %s19, 0
      %s228 = scalar_select %p227, %s19, 0
      %s229 = sadd.s32 %s228, %s226
      %s230 = smul.addr %s229, 4
      %s231 = scalar_lea.vmem %s2, %s230
      %p232 = scmp.eq.s32.totalorder %s20, 0
      // Predicated region
      $region29: #{dice_loss.1} parent=27 // pred_check
        %p233 = pneg %p232
      $region30: #{dice_loss.1} parent=27 // pred_check_branch
        %235 = sbr.rel (%p233) target = $region32
      $region31: #{dice_loss.1} parent=27 // pred_region
        %vm236 = vcmask 3072
        %237 = vst.msk [vmem:[#allocation2] sm:$0xf] %vm236, 0.0
        %238 = vst.msk [vmem:[#allocation3] sm:$0xf] %vm236, 0.0
        %239 = vst.msk [vmem:[#allocation4] sm:$0xf] %vm236, 0.0
      $region32: #{dice_loss.1} parent=27 // pred_fallthru
        _
      %v240 = vld [vmem:[%s211] sm:$0xff]
      %v241 = vld [vmem:[%s222] sm:$0x3]
      %v243 = vcombine.high %v240, %v240
      %vm245 = vcmask 1043456
      %v246 = vsel %vm245, %v240, -inf
      %v247 = vrot.slane %v246, 4
      %v248 = vmax.f32 %v246, %v247
      %v249 = vrot.slane %v248, 2
      %v250 = vmax.f32 %v248, %v249
      %v251 = vrot.slane %v250, 1
      %v252 = vmax.f32 %v250, %v251
      %v253 = vsel %vm245, %v243, -inf
      %v254 = vrot.slane %v253, 4
      %v255 = vmax.f32 %v253, %v254
      %v256 = vrot.slane %v255, 2
      %v257 = vmax.f32 %v255, %v256
      %v258 = vrot.slane %v257, 1
      %v259 = vmax.f32 %v257, %v258
      %v262 = vcombine.low %v252, %v259
      %v264 = vsub.f32 %v240, %v262
      %v265 = vmul.f32 %v264, 1.442695
      %v266 = vpow.pop %v265
      %v268 = vcombine.high %v266, %v266
      %v270 = vsel %vm245, %v266, 0.0
      %v271 = vrot.slane %v270, 4
      %v272 = vadd.f32 %v270, %v271
      %v273 = vrot.slane %v272, 2
      %v274 = vadd.f32 %v272, %v273
      %v275 = vrot.slane %v274, 1
      %v276 = vadd.f32 %v274, %v275
      %v277 = vsel %vm245, %v268, 0.0
      %v278 = vrot.slane %v277, 4
      %v279 = vadd.f32 %v277, %v278
      %v280 = vrot.slane %v279, 2
      %v281 = vadd.f32 %v279, %v280
      %v282 = vrot.slane %v281, 1
      %v283 = vadd.f32 %v281, %v282
      %v284 = vrcp.pop %v276
      %v285 = vrcp.pop %v283
      %v288 = vcombine.low %v284, %v285
      %v290 = vmul.f32 %v266, %v288
      %v291 = vlaneseq
      %v292 = vshrl.u32 %v291, 7
      %v293 = vlaneseq
      %v294 = vshrl.u32 %v293, 7
      %v295 = vsub.s32 0, %v294
      %v296 = vrot.slane %v241, %v295
      %v297 = vlaneseq
      %v298 = vshrl.u32 %v297, 7
      %v299 = vsub.s32 1, %v298
      %v300 = vrot.slane %v241, %v299
      %vm301 = vcmp.eq.s32.totalorder %v296, %v292
      %vm302 = vcmp.eq.s32.totalorder %v300, %v292
      %v303 = vsel %vm301, 1, 0
      %v304 = vsel %vm302, 1, 0
      %v305 = vcvt.s32.f32 %v303
      %v306 = vcvt.s32.f32 %v304
      %v307 = vld [vmem:[#allocation2] sm:$0xf]
      %v310 = vcombine.low %v305, %v306
      %v312 = vmul.f32 %v290, %v310
      %v314 = vcombine.high %v312, %v312
      %v316 = vsel %vm245, %v312, 0.0
      %v317 = vsel %vm245, %v314, 0.0
      %v318 = vadd.f32 %v316, %v317
      %319 = vadd.xlane.f32.xlu0 %v318
      %v320 = vpop.xlane.xlu0 %319
      %v321 = vadd.f32 %v307, %v320
      %vm322 = vcmask 3072
      %323 = vst.msk [vmem:[#allocation2] sm:$0xf] %vm322, %v321
      %v324 = vld [vmem:[#allocation3] sm:$0xf]
      %v326 = vcombine.high %v290, %v290
      %v328 = vsel %vm245, %v290, 0.0
      %v329 = vsel %vm245, %v326, 0.0
      %v330 = vadd.f32 %v328, %v329
      %331 = vadd.xlane.f32.xlu0 %v330
      %v332 = vpop.xlane.xlu0 %331
      %v333 = vadd.f32 %v324, %v332
      %334 = vst.msk [vmem:[#allocation3] sm:$0xf] %vm322, %v333
      %v335 = vld [vmem:[#allocation4] sm:$0xf]
      %v336 = vsel %vm245, %v305, 0.0
      %v337 = vsel %vm245, %v306, 0.0
      %v338 = vadd.f32 %v336, %v337
      %339 = vadd.xlane.f32.xlu0 %v338
      %v340 = vpop.xlane.xlu0 %339
      %v341 = vadd.f32 %v335, %v340
      %342 = vst.msk [vmem:[#allocation4] sm:$0xf] %vm322, %v341
      // Predicated region
      $region33: #{dice_loss.1} parent=27 // pred_check
        %p343 = pneg %p232
      $region34: #{dice_loss.1} parent=27 // pred_check_branch
        %345 = sbr.rel (%p343) target = $region36
      $region35: #{dice_loss.1} parent=27 // pred_region
        %v346 = vld [vmem:[#allocation2] sm:$0xf]
        %v347 = vld [vmem:[#allocation3] sm:$0xf]
        %v348 = vld [vmem:[#allocation4] sm:$0xf]
        %350 = vrot.lane.b32.xlu0 %v347, 1
        %v351 = vpop.permute.xlu0 %350
        %354 = vrot.lane.b32.xlu0 %v348, 2
        %v355 = vpop.permute.xlu0 %354
        %vm357 = vcmask 7168
        %v358 = vsel %vm357, %v346, %v351
        %vm359 = vcmask 15360
        %v360 = vsel %vm359, %v358, %v355
        %vm361 = vcmask 19456
        %362 = vst.msk [vmem:[%s231] sm:$0xf] %vm361, %v360
      $region36: #{dice_loss.1} parent=27 // pred_fallthru
        _
      %p363 = scmp.lt.s32.totalorder %s18, 1
      %s364 = scalar_select %p363, %s18, 1
      %p365 = scmp.lt.s32.totalorder %s19, 0
      %s366 = scalar_select %p365, %s19, 0
      %s367 = sadd.s32 %s366, %s364
      %s368 = smul.addr %s367, 4
      %s369 = scalar_lea.vmem %s2, %s368
      // Predicated region
      $region37: #{dice_loss.1} parent=27 // pred_check
        %p370 = pneg %p112
      $region38: #{dice_loss.1} parent=27 // pred_check_branch
        %372 = sbr.rel (%p370) target = $region40
      $region39: #{dice_loss.1} parent=27 // pred_region
        _
      $region40: #{dice_loss.1} parent=27 // pred_fallthru
        _
    $region28: #{dice_loss.1} parent=5 // pred_fallthru
      _
    %p373 = scmp.le.s32.totalorder 2, %s8
    // Predicated region
    $region41: #{dice_loss.1} parent=5 // pred_check
      %p374 = pneg %p373
    $region42: #{dice_loss.1} parent=5 // pred_check_branch
      %376 = sbr.rel (%p374) target = $region44
    $region43: #{dice_loss.1} parent=5 // pred_region
      %s377 = ssub.s32 %s8, 2
      // Predicated region
      $region45: #{dice_loss.1} parent=43 // pred_check
        %p378 = pneg %p118
      $region46: #{dice_loss.1} parent=43 // pred_check_branch
        %380 = sbr.rel (%p378) target = $region48
      $region47: #{dice_loss.1} parent=43 // pred_region
        %p381 = scmp.lt.s32.totalorder %s21, 1
        %s382 = scalar_select %p381, %s21, 1
        %p383 = scmp.lt.s32.totalorder %s22, 0
        %s384 = scalar_select %p383, %s22, 0
        %s385 = sadd.s32 %s384, %s382
        %s386 = smul.addr %s385, 4
        %s387 = scalar_lea.vmem %s2, %s386
      $region48: #{dice_loss.1} parent=43 // pred_fallthru
        _
    $region44: #{dice_loss.1} parent=5 // pred_fallthru
      _
  $region6: #{dice_loss.1} parent=0 // loop_footer
    %s12 = sadd.s32 1, %s8
  $region7: #{dice_loss.1} parent=0 // loop_footer_branch
    %7 = sbr.rel target = $region3
  $region8: #{dice_loss.1} parent=0 // loop_exit
    _

</llo_original>
